<compile_context>
chip_gen: v7x
topology: tpu7x:2x2x1
jax: 0.10.0
libtpu: 0.0.40
codegen_flags: <defaults>
</compile_context>

<pallas_src>
import jax
import jax.numpy as jnp
from jax.experimental import pallas as pl
from jax.experimental.pallas import tpu as pltpu


def _uncertainty_loss_kernel(buf_ref, out_ref):
    # buf_ref: (1, 2*v_num) f32 in VMEM -> [losses | sigma]
    # out_ref: (1,) f32 in SMEM (scalar result)
    v = buf_ref.shape[1] // 2
    row = buf_ref[...]
    losses = row[:, :v]
    sigma = row[:, v:]
    # Fused elementwise term (VPU mul + EUP log), then ONE XLU reduction
    # collapsed straight to a scalar stored in SMEM.
    fused = losses + jnp.log(sigma * sigma)
    out_ref[0] = jnp.sum(fused)


@jax.custom_vjp
def _uncertainty_loss_core(sigma, loss_vec):
    """sigma: (v_num,) f32, loss_vec: (v_num,) f32 -> scalar f32."""
    v_num = sigma.shape[0]
    # Single merged input buffer: [losses | sigma], shape (1, 2*v_num).
    buf = jnp.concatenate([loss_vec, sigma]).reshape(1, 2 * v_num)
    out = pl.pallas_call(
        _uncertainty_loss_kernel,
        out_shape=jax.ShapeDtypeStruct((1,), jnp.float32),
        in_specs=[pl.BlockSpec((1, 2 * v_num), lambda: (0, 0))],
        out_specs=pl.BlockSpec(memory_space=pltpu.SMEM),
    )(buf)
    return out[0]


def _uncertainty_loss_fwd(sigma, loss_vec):
    return _uncertainty_loss_core(sigma, loss_vec), sigma


def _uncertainty_loss_bwd(sigma, g):
    # d/dsigma_i [ log(prod_j sigma_j^2) ] = 2 / sigma_i ;  d/dloss_i = 1.
    return (g * 2.0 / sigma, g * jnp.ones_like(sigma))


_uncertainty_loss_core.defvjp(_uncertainty_loss_fwd, _uncertainty_loss_bwd)


def uncertainty_loss(sigma, *losses):
    """Mirror of UncertaintyLoss.forward.

    sigma:  (v_num,) learnable parameter vector.
    losses: v_num scalar loss values (the *input varargs of forward).
    Returns a scalar: sum(losses) + log(prod(sigma**2)).
    """
    v_num = sigma.shape[0]
    assert len(losses) == v_num, "expected one scalar loss per task"
    # ONE stack op (no per-scalar asarray/reshape chain).
    loss_vec = jnp.stack(losses).astype(jnp.float32).reshape(v_num)
    return _uncertainty_loss_core(sigma.astype(jnp.float32), loss_vec)


if __name__ == "__main__":
    v_num = 4
    key = jax.random.PRNGKey(0)
    k_sigma, k_losses = jax.random.split(key)

    # Deterministic parameter init (mirrors torch.randn(v_num) in __init__).
    sigma = jax.random.normal(k_sigma, (v_num,), dtype=jnp.float32)

    # v_num scalar losses (the *input varargs of forward).
    loss_vec = jax.random.normal(k_losses, (v_num,), dtype=jnp.float32) ** 2
    loss_scalars = [loss_vec[i] for i in range(v_num)]

    result = uncertainty_loss(sigma, *loss_scalars)
    jax.block_until_ready(result)

    # Reference check in plain JAX (same math as the PyTorch forward:
    # prod-then-log; the kernel's sum-of-logs agrees to float rounding).
    ref = jnp.sum(loss_vec) + jnp.log(jnp.prod(sigma ** 2))
    assert jnp.allclose(result, ref, rtol=1e-5, atol=1e-5), (result, ref)

    print("KERNEL_OK")
</pallas_src>

<mosaic_0001>
module attributes {stable_mosaic.version = 11 : i64} {
  func.func @_uncertainty_loss_kernel(%arg0: memref<1x8xf32, #tpu.memory_space<vmem>>, %arg1: memref<1xf32, #tpu.memory_space<smem>>) attributes {dimension_semantics = [], scalar_prefetch = 0 : i64, scratch_operands = 0 : i64, tpu.core_type = #tpu.core_type<tc>} {
    %c0 = arith.constant 0 : index
    %c0_0 = arith.constant 0 : index
    %0 = vector.load %arg0[%c0, %c0_0] : memref<1x8xf32, #tpu.memory_space<vmem>>, vector<1x8xf32>
    %1 = vector.extract_strided_slice %0 {offsets = [0, 0], sizes = [1, 4], strides = [1, 1]} : vector<1x8xf32> to vector<1x4xf32>
    %2 = vector.extract_strided_slice %0 {offsets = [0, 4], sizes = [1, 4], strides = [1, 1]} : vector<1x8xf32> to vector<1x4xf32>
    %3 = arith.mulf %2, %2 : vector<1x4xf32>
    %4 = math.log %3 : vector<1x4xf32>
    %5 = arith.addf %1, %4 : vector<1x4xf32>
    %6 = vector.shape_cast %5 : vector<1x4xf32> to vector<1x1x4xf32>
    %cst = arith.constant dense<0.000000e+00> : vector<1xf32>
    %7 = vector.multi_reduction <add>, %6, %cst [1, 2] : vector<1x1x4xf32> to vector<1xf32>
    %8 = vector.shape_cast %7 : vector<1xf32> to vector<1x1x1xf32>
    %9 = vector.extract %8[0, 0, 0] : f32 from vector<1x1x1xf32>
    %c0_1 = arith.constant 0 : index
    %10 = memref.load %arg1[%c0_1] : memref<1xf32, #tpu.memory_space<smem>>
    memref.store %9, %arg1[%c0_1] : memref<1xf32, #tpu.memory_space<smem>>
    return
  }
}

</mosaic_0001>

<llo_original>
// kernel: tpu_custom_call.1
$region0: #{tpu_custom_call.1}
  #allocation0 [shape = 'u32[]', space=smem, size = 0x4, offset = 0x4, fixed_abs, tag = 'smem constant byte address 0x4 - core index']
  #allocation1 [shape = 'u32[144,128]{1,0:T(1,128)}', space=vmem, size = 0x12000, scoped, tag = 'internal scratch']
  %s0 = inlined_call_operand.hbm [shape: f32[1,8], index: 0, kind: input, shape index: {}]
  %s1 = inlined_call_operand.hbm [shape: f32[1], index: 1, kind: output, shape index: {}]
  %s2 = sld [smem:[#allocation0]]
  $region18: #{tpu_custom_call.1} parent=0
    _
  %s4 = ssub.s32 1, %s2
  %s5 = scalar_select 0, %s4, %s2
  $region1: #{tpu_custom_call.1} parent=0
    #allocation2 [shape = 'u8[512]{0}', space=vmem, size = 0x400, scoped, tag = 'input window, operand 0, single buffered']
    #allocation3 [shape = 's32[1]{0}', space=sflag, size = 0x4, scoped, tag = 'scoped memory for tpu_custom_call.1']
    #allocation4 [shape = 's32[1]{0}', space=sflag, size = 0x4, scoped, tag = 'scoped memory for tpu_custom_call.1']
    #allocation5 [shape = 'u8[512]{0}', space=smem, size = 0x200, scoped, tag = 'output window, operand 0, single buffered']
    %6 = vsyncpa [#allocation3], 0
    %7 = vsyncpa [#allocation4], 0
    // Predicated region
    $region2: #{tpu_custom_call.1} parent=1 // pred_check
      _
    $region3: #{tpu_custom_call.1} parent=1 // pred_check_branch
      %9 = sbr.rel (0) target = $region5
    $region4: #{tpu_custom_call.1} parent=1 // pred_region
      %s11 = ssub.s32 16, 16
      %12 = vsyncadd [#allocation3], %s11
      %s14 = sshll.u32 [#allocation2], 4
      %s15 = int_to_ptr.vmem [resolvable:$true] %s14
      %17 = dma.hbm_to_vmem [thread:$0]  %s0, 16, %s15, [#allocation3]
    $region5: #{tpu_custom_call.1} parent=1 // pred_fallthru
      _
    // Predicated region
    $region6: #{tpu_custom_call.1} parent=1 // pred_check
      _
    $region7: #{tpu_custom_call.1} parent=1 // pred_check_branch
      %19 = sbr.rel (0) target = $region9
    $region8: #{tpu_custom_call.1} parent=1 // pred_region
      %20 = dma.done [#allocation3], 16
    $region9: #{tpu_custom_call.1} parent=1 // pred_fallthru
      _
    %v21 = vld [vmem:[#allocation2] sm:$0x1]
    %v22 = vmul.f32 %v21, %v21
    %v23 = vlog2.pop %v22
    %v24 = vmul.f32 %v23, 0.6931472
    %26 = vrot.lane.b32.xlu0 %v24, 124
    %v27 = vpop.permute.xlu0 %26
    %v29 = vadd.f32 %v21, %v27
    %vm30 = vcmask 24576
    %v31 = vsel %vm30, %v29, 0.0
    %32 = vadd.xlane.f32.xlu0 %v31
    %v33 = vpop.xlane.xlu0 %32
    %v34 = vrot.slane %v33, 4
    %v35 = vadd.f32 %v33, %v34
    %v36 = vrot.slane %v35, 2
    %v37 = vadd.f32 %v35, %v36
    %v38 = vrot.slane %v37, 1
    %v39 = vadd.f32 %v37, %v38
    %s40 = vtos %v39
    %s41 = scalar_lea.smem [#allocation5], 0
    %42 = sst [smem:[%s41]] %s40
    // Predicated region
    $region10: #{tpu_custom_call.1} parent=1 // pred_check
      _
    $region11: #{tpu_custom_call.1} parent=1 // pred_check_branch
      %44 = sbr.rel (0) target = $region13
    $region12: #{tpu_custom_call.1} parent=1 // pred_region
      %s46 = ssub.s32 16, 16
      %47 = vsyncadd [#allocation4], %s46
      %50 = dma.smem_to_hbm [#allocation5], 16, %s1, [#allocation4]
    $region13: #{tpu_custom_call.1} parent=1 // pred_fallthru
      _
    // Predicated region
    $region14: #{tpu_custom_call.1} parent=1 // pred_check
      _
    $region15: #{tpu_custom_call.1} parent=1 // pred_check_branch
      %52 = sbr.rel (0) target = $region17
    $region16: #{tpu_custom_call.1} parent=1 // pred_region
      %53 = dma.done [#allocation4], 16
    $region17: #{tpu_custom_call.1} parent=1 // pred_fallthru
      _
    %54 = sfence
    %55 = vsyncpa [#allocation3], 1
    %56 = vsyncpa [#allocation4], 1

</llo_original>
